<compile_context>
chip_gen: v7x
topology: tpu7x:2x2x1
jax: 0.10.0
libtpu: 0.0.40
codegen_flags: <defaults>
</compile_context>

<pallas_src>
import functools
import numpy as np
import jax
import jax.numpy as jnp
from jax.experimental import pallas as pl
from jax.experimental.pallas import tpu as pltpu

BN_EPS = 1e-5
_LANE = 128


def _ceil_to(v, m):
    return ((v + m - 1) // m) * m


# ---------------------------------------------------------------------------
# Kernel 1: per-point MLP (conv1/conv2/conv3, BN folded) + max over points.
# Grid: (batch_blocks, point_tiles).  bt/tn are static (partial-applied).
# Output block (1, Bt, 1024) is resident across the point-tile axis and acts
# as the running-max accumulator.
# ---------------------------------------------------------------------------
def _pointnet_features_kernel(bt, tn,
                              x_ref,
                              w1_ref, b1_ref,
                              w2_ref, b2_ref,
                              w3_ref, b3_ref,
                              out_ref):
    ni = pl.program_id(1)

    x = x_ref[0]                                             # (bt*tn, 3) f32

    # conv1 (K=3): VPU broadcast FMAs instead of a padded MXU contraction.
    w1 = w1_ref[...]                                         # (3, 64) f32
    h = (x[:, 0:1] * w1[0:1, :]
         + x[:, 1:2] * w1[1:2, :]
         + x[:, 2:3] * w1[2:3, :])                           # (bt*tn, 64)
    h = jnp.maximum(h + b1_ref[...], 0.0)                    # folded bn1 + relu

    # conv2 / conv3: bf16 MXU matmuls, f32 accumulate, shift-add + ReLU (f32).
    h = jnp.dot(h.astype(jnp.bfloat16), w2_ref[...],
                preferred_element_type=jnp.float32)          # (bt*tn, 128)
    h = jnp.maximum(h + b2_ref[...], 0.0)
    h = jnp.dot(h.astype(jnp.bfloat16), w3_ref[...],
                preferred_element_type=jnp.float32)          # (bt*tn, 1024)
    h = jnp.maximum(h + b3_ref[...], 0.0)

    # Per-batch-row max over this point tile (free leading-dim reshape, then
    # straight vreg max trees — no slice/concat).
    tile_max = jnp.max(h.reshape(bt, tn, 1024), axis=1)      # (bt, 1024)

    @pl.when(ni == 0)
    def _init():
        out_ref[0] = tile_max

    @pl.when(ni > 0)
    def _acc():
        out_ref[0] = jnp.maximum(out_ref[0], tile_max)


# ---------------------------------------------------------------------------
# Kernel 2: classifier head fc1/fc2/fc3 (BN folded) over pooled features,
# batched over all rows at once (no M=1 weight streaming).
# ---------------------------------------------------------------------------
def _pointnet_head_kernel(f_ref,
                          w4_ref, b4_ref,
                          w5_ref, b5_ref,
                          w6_ref, b6_ref,
                          out_ref):
    g = jnp.dot(f_ref[...].astype(jnp.bfloat16), w4_ref[...],
                preferred_element_type=jnp.float32)          # (TB, 512)
    g = jnp.maximum(g + b4_ref[...], 0.0)                    # folded bn4 + relu
    g = jnp.dot(g.astype(jnp.bfloat16), w5_ref[...],
                preferred_element_type=jnp.float32)          # (TB, 256)
    g = jnp.maximum(g + b5_ref[...], 0.0)                    # folded bn5 + relu
    # Dropout(p=0.3) is identity at inference time.
    out_ref[...] = (jnp.dot(g.astype(jnp.bfloat16), w6_ref[...],
                            preferred_element_type=jnp.float32)
                    + b6_ref[...])                           # (TB, C_pad)


def _const_spec(a):
    """Grid-invariant weight: full block, constant index, single-buffered."""
    shp = a.shape
    return pl.BlockSpec(shp, lambda *_: (0,) * len(shp),
                        pipeline_mode=pl.Buffered(1))


def pointnet_forward(x, params):
    """x: (B, N, 3) float32. Returns logits (B, num_classes) float32."""
    (w1t, b1, w2t, b2, w3t, b3,
     w4t, b4, w5t, b5, w6t, b6) = params
    B, N, Cin = x.shape
    assert Cin == 3
    num_classes = w6t.shape[1]

    # --- stage 1 tiling: point tile TN, batch block Bt ----------------------
    TN = min(1024, _ceil_to(N, 8))          # bounds the (Bt*TN,1024) temp
    N_pad = _ceil_to(N, TN)
    nt = N_pad // TN
    if nt == 1:
        # Small point clouds: pack batch rows so the MXU sees ~512-1024 rows
        # (Bt*TN <= 1024), but keep nb >= 2 so v7x shards across both TCs.
        Bt = max(1, min(1024 // TN, B))
        if B >= 2:
            Bt = min(Bt, (B + 1) // 2)
    else:
        Bt = 1
    B_pad = _ceil_to(B, Bt)
    nb = B_pad // Bt

    # Pad points (replicate last point: max unchanged) and batch (zeros).
    xp = x
    if N_pad != N:
        xp = jnp.concatenate(
            [xp, jnp.broadcast_to(xp[:, -1:, :], (B, N_pad - N, 3))], axis=1)
    if B_pad != B:
        xp = jnp.concatenate(
            [xp, jnp.zeros((B_pad - B, N_pad, 3), xp.dtype)], axis=0)
    # Group Bt batch rows per grid step (Bt > 1 only when nt == 1, so each
    # contiguous TN-row group inside a block is exactly one batch element).
    xp = xp.reshape(nb, Bt * N_pad, 3)

    # bf16 MXU weights (cast AFTER the f32 BN fold); conv1 + shifts stay f32.
    w2b = w2t.astype(jnp.bfloat16)
    w3b = w3t.astype(jnp.bfloat16)
    feat_consts = (w1t, b1, w2b, b2, w3b, b3)

    feat_flops = 2 * B_pad * N_pad * (3 * 64 + 64 * 128 + 128 * 1024)
    feat_bytes = (int(xp.size) * 4
                  + sum(int(a.size) * a.dtype.itemsize for a in feat_consts)
                  + B_pad * 1024 * 4)

    feats = pl.pallas_call(
        functools.partial(_pointnet_features_kernel, Bt, TN),
        out_shape=jax.ShapeDtypeStruct((nb, Bt, 1024), jnp.float32),
        grid=(nb, nt),
        in_specs=[pl.BlockSpec((1, Bt * TN, 3), lambda bi, ni: (bi, ni, 0))]
                 + [_const_spec(a) for a in feat_consts],
        out_specs=pl.BlockSpec((1, Bt, 1024), lambda bi, ni: (bi, 0, 0)),
        compiler_params=pltpu.CompilerParams(
            dimension_semantics=("parallel", "arbitrary"),
            vmem_limit_bytes=32 * 1024 * 1024),
        cost_estimate=pl.CostEstimate(flops=feat_flops, transcendentals=0,
                                      bytes_accessed=feat_bytes),
    )(xp, *feat_consts)
    feats = feats.reshape(B_pad, 1024)

    # --- stage 2: classifier head, batched over all pooled rows -------------
    C_pad = _ceil_to(max(num_classes, _LANE), _LANE)   # lane-dense logits
    w4b = w4t.astype(jnp.bfloat16)
    w5b = w5t.astype(jnp.bfloat16)
    w6b = jnp.zeros((w6t.shape[0], C_pad), jnp.bfloat16)
    w6b = w6b.at[:, :num_classes].set(w6t.astype(jnp.bfloat16))
    b6p = jnp.zeros((1, C_pad), jnp.float32).at[:, :num_classes].set(b6)
    head_consts = (w4b, b4, w5b, b5, w6b, b6p)

    TB = _ceil_to(min(B_pad, 512), 8)
    B_head = _ceil_to(B_pad, TB)
    if B_head != B_pad:
        feats = jnp.concatenate(
            [feats, jnp.zeros((B_head - B_pad, 1024), feats.dtype)], axis=0)
    nbh = B_head // TB

    head_flops = 2 * B_head * (1024 * 512 + 512 * 256 + 256 * C_pad)
    head_bytes = (B_head * 1024 * 4
                  + sum(int(a.size) * a.dtype.itemsize for a in head_consts)
                  + B_head * C_pad * 4)

    logits = pl.pallas_call(
        _pointnet_head_kernel,
        out_shape=jax.ShapeDtypeStruct((B_head, C_pad), jnp.float32),
        grid=(nbh,),
        in_specs=[pl.BlockSpec((TB, 1024), lambda i: (i, 0))]
                 + [_const_spec(a) for a in head_consts],
        out_specs=pl.BlockSpec((TB, C_pad), lambda i: (i, 0)),
        compiler_params=pltpu.CompilerParams(
            dimension_semantics=("parallel",),
            vmem_limit_bytes=32 * 1024 * 1024),
        cost_estimate=pl.CostEstimate(flops=head_flops, transcendentals=0,
                                      bytes_accessed=head_bytes),
    )(feats, *head_consts)

    return logits[:B, :num_classes]


# ---------------------------------------------------------------------------
# Deterministic parameter construction (synthetic; mirrors PointNet.__init__)
# ---------------------------------------------------------------------------
def _fold_bn(w, b_lin, gamma, beta, mean, var):
    """Fold linear/conv1d(k=1) bias + eval-mode BatchNorm fully into
    (W^T * scale, shift) in f32 (cast to bf16 happens later, in the wrapper)."""
    scale = gamma / jnp.sqrt(var + BN_EPS)                    # (C_out,)
    shift = (b_lin - mean) * scale + beta                     # (C_out,)
    w_folded = (w.T * scale[None, :]).astype(jnp.float32)     # (C_in, C_out)
    return w_folded, shift[None, :].astype(jnp.float32)


def make_params(num_classes, key):
    ks = jax.random.split(key, 12)

    def dense(k, out_c, in_c, scale=0.05):
        kw, kb = jax.random.split(k)
        w = scale * jax.random.normal(kw, (out_c, in_c), jnp.float32)
        b = scale * jax.random.normal(kb, (out_c,), jnp.float32)
        return w, b

    def bn(k, c):
        k1, k2, k3, k4 = jax.random.split(k, 4)
        gamma = 1.0 + 0.1 * jax.random.normal(k1, (c,), jnp.float32)
        beta = 0.1 * jax.random.normal(k2, (c,), jnp.float32)
        mean = 0.1 * jax.random.normal(k3, (c,), jnp.float32)
        var = jnp.abs(1.0 + 0.1 * jax.random.normal(k4, (c,), jnp.float32))
        return gamma, beta, mean, var

    w1, bc1 = dense(ks[0], 64, 3)
    w2, bc2 = dense(ks[1], 128, 64)
    w3, bc3 = dense(ks[2], 1024, 128)
    w4, bf4 = dense(ks[3], 512, 1024)
    w5, bf5 = dense(ks[4], 256, 512)
    w6, bf6 = dense(ks[5], num_classes, 256)

    w1t, b1 = _fold_bn(w1, bc1, *bn(ks[6], 64))
    w2t, b2 = _fold_bn(w2, bc2, *bn(ks[7], 128))
    w3t, b3 = _fold_bn(w3, bc3, *bn(ks[8], 1024))
    w4t, b4 = _fold_bn(w4, bf4, *bn(ks[9], 512))
    w5t, b5 = _fold_bn(w5, bf5, *bn(ks[10], 256))
    w6t, b6 = w6.T.astype(jnp.float32), bf6[None, :]

    return (w1t, b1, w2t, b2, w3t, b3, w4t, b4, w5t, b5, w6t, b6)


def reference_forward(x, params):
    """Pure-JAX f32 reference with identical folded parameters."""
    (w1t, b1, w2t, b2, w3t, b3, w4t, b4, w5t, b5, w6t, b6) = params
    h = jnp.maximum(x @ w1t + b1, 0.0)
    h = jnp.maximum(h @ w2t + b2, 0.0)
    h = jnp.maximum(h @ w3t + b3, 0.0)
    f = jnp.max(h, axis=1)                    # max over points
    h = jnp.maximum(f @ w4t + b4, 0.0)
    h = jnp.maximum(h @ w5t + b5, 0.0)
    return h @ w6t + b6


if __name__ == "__main__":
    B, N, NUM_CLASSES = 2, 16, 10
    key = jax.random.PRNGKey(0)
    kx, kp = jax.random.split(key)

    x = jax.random.normal(kx, (B, N, 3), jnp.float32)   # (batch, points, xyz)
    params = make_params(NUM_CLASSES, kp)

    logits = pointnet_forward(x, params)
    jax.block_until_ready(logits)

    ref = reference_forward(x, params)
    # bf16 MXU inputs (f32 accumulate) -> looser tolerance than pure f32.
    np.testing.assert_allclose(np.asarray(logits), np.asarray(ref),
                               rtol=2e-2, atol=2e-2)
    print("KERNEL_OK")
</pallas_src>

<mosaic_0001>
module attributes {stable_mosaic.version = 11 : i64} {
  func.func @_pointnet_features_kernel(%arg0: i32, %arg1: i32, %arg2: memref<1x16x3xf32, #tpu.memory_space<vmem>>, %arg3: memref<3x64xf32, #tpu.memory_space<vmem>>, %arg4: memref<1x64xf32, #tpu.memory_space<vmem>>, %arg5: memref<64x128xbf16, #tpu.memory_space<vmem>>, %arg6: memref<1x128xf32, #tpu.memory_space<vmem>>, %arg7: memref<128x1024xbf16, #tpu.memory_space<vmem>>, %arg8: memref<1x1024xf32, #tpu.memory_space<vmem>>, %arg9: memref<1x1x1024xf32, #tpu.memory_space<vmem>>) attributes {dimension_semantics = [#tpu.dimension_semantics<parallel>, #tpu.dimension_semantics<arbitrary>], iteration_bounds = array<i64: 2, 1>, scalar_prefetch = 0 : i64, scratch_operands = 0 : i64, tpu.core_type = #tpu.core_type<tc>, window_params = [{transform_indices = @transform_0, window_bounds = array<i64: 1, 16, 3>}, {pipeline_mode = #tpu.pipeline_mode<synchronous>, transform_indices = @transform_1, window_bounds = array<i64: 3, 64>}, {pipeline_mode = #tpu.pipeline_mode<synchronous>, transform_indices = @transform_2, window_bounds = array<i64: 1, 64>}, {pipeline_mode = #tpu.pipeline_mode<synchronous>, transform_indices = @transform_3, window_bounds = array<i64: 64, 128>}, {pipeline_mode = #tpu.pipeline_mode<synchronous>, transform_indices = @transform_4, window_bounds = array<i64: 1, 128>}, {pipeline_mode = #tpu.pipeline_mode<synchronous>, transform_indices = @transform_5, window_bounds = array<i64: 128, 1024>}, {pipeline_mode = #tpu.pipeline_mode<synchronous>, transform_indices = @transform_6, window_bounds = array<i64: 1, 1024>}, {transform_indices = @transform_7, window_bounds = array<i64: 1, 1, 1024>}]} {
    %c0 = arith.constant 0 : index
    %c0_0 = arith.constant 0 : index
    %c0_1 = arith.constant 0 : index
    %0 = vector.load %arg2[%c0, %c0_0, %c0_1] : memref<1x16x3xf32, #tpu.memory_space<vmem>>, vector<1x16x3xf32>
    %1 = vector.shape_cast %0 : vector<1x16x3xf32> to vector<16x3xf32>
    %c0_2 = arith.constant 0 : index
    %c0_3 = arith.constant 0 : index
    %2 = vector.load %arg3[%c0_2, %c0_3] : memref<3x64xf32, #tpu.memory_space<vmem>>, vector<3x64xf32>
    %3 = vector.extract_strided_slice %1 {offsets = [0, 0], sizes = [16, 1], strides = [1, 1]} : vector<16x3xf32> to vector<16x1xf32>
    %4 = vector.extract_strided_slice %2 {offsets = [0, 0], sizes = [1, 64], strides = [1, 1]} : vector<3x64xf32> to vector<1x64xf32>
    %5 = vector.broadcast %3 : vector<16x1xf32> to vector<16x64xf32>
    %6 = vector.broadcast %4 : vector<1x64xf32> to vector<16x64xf32>
    %7 = arith.mulf %5, %6 : vector<16x64xf32>
    %8 = vector.extract_strided_slice %1 {offsets = [0, 1], sizes = [16, 1], strides = [1, 1]} : vector<16x3xf32> to vector<16x1xf32>
    %9 = vector.extract_strided_slice %2 {offsets = [1, 0], sizes = [1, 64], strides = [1, 1]} : vector<3x64xf32> to vector<1x64xf32>
    %10 = vector.broadcast %8 : vector<16x1xf32> to vector<16x64xf32>
    %11 = vector.broadcast %9 : vector<1x64xf32> to vector<16x64xf32>
    %12 = arith.mulf %10, %11 : vector<16x64xf32>
    %13 = arith.addf %7, %12 : vector<16x64xf32>
    %14 = vector.extract_strided_slice %1 {offsets = [0, 2], sizes = [16, 1], strides = [1, 1]} : vector<16x3xf32> to vector<16x1xf32>
    %15 = vector.extract_strided_slice %2 {offsets = [2, 0], sizes = [1, 64], strides = [1, 1]} : vector<3x64xf32> to vector<1x64xf32>
    %16 = vector.broadcast %14 : vector<16x1xf32> to vector<16x64xf32>
    %17 = vector.broadcast %15 : vector<1x64xf32> to vector<16x64xf32>
    %18 = arith.mulf %16, %17 : vector<16x64xf32>
    %19 = arith.addf %13, %18 : vector<16x64xf32>
    %c0_4 = arith.constant 0 : index
    %c0_5 = arith.constant 0 : index
    %20 = vector.load %arg4[%c0_4, %c0_5] : memref<1x64xf32, #tpu.memory_space<vmem>>, vector<1x64xf32>
    %21 = vector.broadcast %20 : vector<1x64xf32> to vector<16x64xf32>
    %22 = arith.addf %19, %21 : vector<16x64xf32>
    %cst = arith.constant 0.000000e+00 : f32
    %23 = vector.broadcast %cst : f32 to vector<16x64xf32>
    %24 = arith.maximumf %22, %23 : vector<16x64xf32>
    %25 = arith.truncf %24 : vector<16x64xf32> to vector<16x64xbf16>
    %c0_6 = arith.constant 0 : index
    %c0_7 = arith.constant 0 : index
    %26 = vector.load %arg5[%c0_6, %c0_7] : memref<64x128xbf16, #tpu.memory_space<vmem>>, vector<64x128xbf16>
    %cst_8 = arith.constant dense<0.000000e+00> : vector<16x128xf32>
    %27 = tpu.matmul %25, %26, %cst_8 {dimension_numbers = #tpu.dot_dimension_numbers<[1], [0], [0], [1], [0, 0, 1, 1], [], []>} : vector<16x64xbf16>, vector<64x128xbf16>, vector<16x128xf32> -> vector<16x128xf32>
    %c0_9 = arith.constant 0 : index
    %c0_10 = arith.constant 0 : index
    %28 = vector.load %arg6[%c0_9, %c0_10] : memref<1x128xf32, #tpu.memory_space<vmem>>, vector<1x128xf32>
    %29 = vector.broadcast %28 : vector<1x128xf32> to vector<16x128xf32>
    %30 = arith.addf %27, %29 : vector<16x128xf32>
    %cst_11 = arith.constant 0.000000e+00 : f32
    %31 = vector.broadcast %cst_11 : f32 to vector<16x128xf32>
    %32 = arith.maximumf %30, %31 : vector<16x128xf32>
    %33 = arith.truncf %32 : vector<16x128xf32> to vector<16x128xbf16>
    %c0_12 = arith.constant 0 : index
    %c0_13 = arith.constant 0 : index
    %34 = vector.load %arg7[%c0_12, %c0_13] : memref<128x1024xbf16, #tpu.memory_space<vmem>>, vector<128x1024xbf16>
    %cst_14 = arith.constant dense<0.000000e+00> : vector<16x1024xf32>
    %35 = tpu.matmul %33, %34, %cst_14 {dimension_numbers = #tpu.dot_dimension_numbers<[1], [0], [0], [1], [0, 0, 1, 1], [], []>} : vector<16x128xbf16>, vector<128x1024xbf16>, vector<16x1024xf32> -> vector<16x1024xf32>
    %c0_15 = arith.constant 0 : index
    %c0_16 = arith.constant 0 : index
    %36 = vector.load %arg8[%c0_15, %c0_16] : memref<1x1024xf32, #tpu.memory_space<vmem>>, vector<1x1024xf32>
    %37 = vector.broadcast %36 : vector<1x1024xf32> to vector<16x1024xf32>
    %38 = arith.addf %35, %37 : vector<16x1024xf32>
    %cst_17 = arith.constant 0.000000e+00 : f32
    %39 = vector.broadcast %cst_17 : f32 to vector<16x1024xf32>
    %40 = arith.maximumf %38, %39 : vector<16x1024xf32>
    %41 = vector.shape_cast %40 : vector<16x1024xf32> to vector<1x16x1024xf32>
    %cst_18 = arith.constant dense<0xFF800000> : vector<1x1024xf32>
    %42 = vector.multi_reduction <maximumf>, %41, %cst_18 [1] : vector<1x16x1024xf32> to vector<1x1024xf32>
    %c0_i32 = arith.constant 0 : i32
    %43 = arith.cmpi eq, %arg1, %c0_i32 : i32
    %44 = arith.extui %43 : i1 to i32
    %c0_i32_19 = arith.constant 0 : i32
    %45 = arith.cmpi ne, %44, %c0_i32_19 : i32
    scf.if %45 {
      %c0_22 = arith.constant 0 : index
      %c0_23 = arith.constant 0 : index
      %c0_24 = arith.constant 0 : index
      %49 = vector.load %arg9[%c0_22, %c0_23, %c0_24] : memref<1x1x1024xf32, #tpu.memory_space<vmem>>, vector<1x1x1024xf32>
      %50 = vector.shape_cast %49 : vector<1x1x1024xf32> to vector<1x1024xf32>
      %51 = vector.shape_cast %42 : vector<1x1024xf32> to vector<1x1x1024xf32>
      tpu.vector_store %arg9[%c0_22, %c0_23, %c0_24], %51 {strides = array<i32>} : memref<1x1x1024xf32, #tpu.memory_space<vmem>>, vector<1x1x1024xf32>,
    } else {
    }
    %c0_i32_20 = arith.constant 0 : i32
    %46 = arith.cmpi sgt, %arg1, %c0_i32_20 : i32
    %47 = arith.extui %46 : i1 to i32
    %c0_i32_21 = arith.constant 0 : i32
    %48 = arith.cmpi ne, %47, %c0_i32_21 : i32
    scf.if %48 {
      %c0_22 = arith.constant 0 : index
      %c0_23 = arith.constant 0 : index
      %c0_24 = arith.constant 0 : index
      %49 = vector.load %arg9[%c0_22, %c0_23, %c0_24] : memref<1x1x1024xf32, #tpu.memory_space<vmem>>, vector<1x1x1024xf32>
      %50 = vector.shape_cast %49 : vector<1x1x1024xf32> to vector<1x1024xf32>
      %51 = arith.maximumf %50, %42 : vector<1x1024xf32>
      %c0_25 = arith.constant 0 : index
      %c0_26 = arith.constant 0 : index
      %c0_27 = arith.constant 0 : index
      %52 = vector.load %arg9[%c0_25, %c0_26, %c0_27] : memref<1x1x1024xf32, #tpu.memory_space<vmem>>, vector<1x1x1024xf32>
      %53 = vector.shape_cast %52 : vector<1x1x1024xf32> to vector<1x1024xf32>
      %54 = vector.shape_cast %51 : vector<1x1024xf32> to vector<1x1x1024xf32>
      tpu.vector_store %arg9[%c0_25, %c0_26, %c0_27], %54 {strides = array<i32>} : memref<1x1x1024xf32, #tpu.memory_space<vmem>>, vector<1x1x1024xf32>,
    } else {
    }
    return
  }
  func.func @transform_0(%arg0: i32, %arg1: i32) -> (i32, i32, i32) {
    %c0_i32 = arith.constant 0 : i32
    %c0_i32_0 = arith.constant 0 : i32
    return %arg0, %arg1, %c0_i32 : i32, i32, i32
  }
  func.func @transform_1(%arg0: i32, %arg1: i32) -> (i32, i32) {
    %c0_i32 = arith.constant 0 : i32
    %c0_i32_0 = arith.constant 0 : i32
    %c0_i32_1 = arith.constant 0 : i32
    return %c0_i32, %c0_i32_0 : i32, i32
  }
  func.func @transform_2(%arg0: i32, %arg1: i32) -> (i32, i32) {
    %c0_i32 = arith.constant 0 : i32
    %c0_i32_0 = arith.constant 0 : i32
    %c0_i32_1 = arith.constant 0 : i32
    return %c0_i32, %c0_i32_0 : i32, i32
  }
  func.func @transform_3(%arg0: i32, %arg1: i32) -> (i32, i32) {
    %c0_i32 = arith.constant 0 : i32
    %c0_i32_0 = arith.constant 0 : i32
    %c0_i32_1 = arith.constant 0 : i32
    return %c0_i32, %c0_i32_0 : i32, i32
  }
  func.func @transform_4(%arg0: i32, %arg1: i32) -> (i32, i32) {
    %c0_i32 = arith.constant 0 : i32
    %c0_i32_0 = arith.constant 0 : i32
    %c0_i32_1 = arith.constant 0 : i32
    return %c0_i32, %c0_i32_0 : i32, i32
  }
  func.func @transform_5(%arg0: i32, %arg1: i32) -> (i32, i32) {
    %c0_i32 = arith.constant 0 : i32
    %c0_i32_0 = arith.constant 0 : i32
    %c0_i32_1 = arith.constant 0 : i32
    return %c0_i32, %c0_i32_0 : i32, i32
  }
  func.func @transform_6(%arg0: i32, %arg1: i32) -> (i32, i32) {
    %c0_i32 = arith.constant 0 : i32
    %c0_i32_0 = arith.constant 0 : i32
    %c0_i32_1 = arith.constant 0 : i32
    return %c0_i32, %c0_i32_0 : i32, i32
  }
  func.func @transform_7(%arg0: i32, %arg1: i32) -> (i32, i32, i32) {
    %c0_i32 = arith.constant 0 : i32
    %c0_i32_0 = arith.constant 0 : i32
    %c0_i32_1 = arith.constant 0 : i32
    return %arg0, %c0_i32, %c0_i32_0 : i32, i32, i32
  }
}

</mosaic_0001>

<llo_original>
// kernel: tpu_custom_call.1
$region0: #{tpu_custom_call.1}
  #allocation0 [shape = 'u32[]', space=smem, size = 0x4, offset = 0x4, fixed_abs, tag = 'smem constant byte address 0x4 - core index']
  #allocation1 [shape = 'u32[144,128]{1,0:T(1,128)}', space=vmem, size = 0x12000, scoped, tag = 'internal scratch']
  %s0 = inlined_call_operand.vmem [shape: f32[2,16,3], index: 0, kind: input, shape index: {}]
  %s1 = inlined_call_operand.vmem [shape: f32[3,64], index: 1, kind: input, shape index: {}]
  %s2 = inlined_call_operand.vmem [shape: f32[1,64], index: 2, kind: input, shape index: {}]
  %s3 = inlined_call_operand.vmem [shape: bf16[64,128], index: 3, kind: input, shape index: {}]
  %s4 = inlined_call_operand.vmem [shape: f32[1,128], index: 4, kind: input, shape index: {}]
  %s5 = inlined_call_operand.hbm [shape: bf16[128,1024], index: 5, kind: input, shape index: {}]
  %s6 = inlined_call_operand.vmem [shape: f32[1,1024], index: 6, kind: input, shape index: {}]
  %s7 = inlined_call_operand.hbm [shape: f32[2,1,1024], index: 7, kind: output, shape index: {}]
  %s8 = sld [smem:[#allocation0]]
  $region73: #{tpu_custom_call.1} parent=0
    _
  %s10 = ssub.s32 1, %s8
  %s11 = scalar_select 0, %s10, %s8
  $region1: #{tpu_custom_call.1} parent=0
    #allocation2 [shape = 'u8[262144]{0}', space=vmem, size = 0x40000, scoped, tag = 'input window, operand 5, single buffered']
    #allocation3 [shape = 's32[2]{0}', space=sflag, size = 0x8, scoped, tag = 'scoped memory for tpu_custom_call.1']
    #allocation4 [shape = 's32[2]{0}', space=sflag, size = 0x8, scoped, tag = 'scoped memory for tpu_custom_call.1']
    #allocation5 [shape = 'u8[8192]{0}', space=vmem, size = 0x2000, scoped, tag = 'output window, operand 0']
    %12 = vsyncpa [#allocation3], 0
    %13 = vsyncpa [#allocation4], 0
    %s14 = scalar_lea.sflag [#allocation4], 1
    %15 = vsyncpa %s14, 0
    loop: start=0, step=1, limit=4
    $region2: #{tpu_custom_call.1} parent=1 // loop_pre_header
      _
    $region3: #{tpu_custom_call.1} parent=1 // loop_header
      %s17 = sphi 0, %s21
      %p18 = scmp.ge.s32.totalorder %s17, 4
      %s24 = sphi 0, %s36
      %s25 = sphi 0, %s32
      %s26 = sphi 0, %s24
      %s27 = sphi 0, %s25
      %s28 = sphi 0, %s26
      %s29 = sphi 0, %s27
      %s41 = sphi 0, %s43
      %s44 = sphi 0, %s41
      %s45 = sphi 0, %s44
      %s61 = sphi 0, %s45
      %s65 = sphi 0, %s65
      %s67 = sphi 0, %s65
      %s68 = sphi 0, %s67
      %s82 = sphi 0, %s68
      %s86 = sphi 0, %s86
      %s88 = sphi 0, %s86
      %s89 = sphi 0, %s88
      %s103 = sphi 0, %s89
      %s107 = sphi 0, %s107
      %s109 = sphi 0, %s107
      %s110 = sphi 0, %s109
      %s124 = sphi 0, %s110
      %s128 = sphi 0, %s128
      %s130 = sphi 0, %s128
      %s131 = sphi 0, %s130
      %s145 = sphi 0, %s131
      %s149 = sphi 0, %s149
      %s151 = sphi 0, %s149
      %s152 = sphi 0, %s151
      %s166 = sphi 0, %s152
      %s170 = sphi 0, %s170
      %s172 = sphi 0, %s170
      %s173 = sphi 0, %s172
      %s187 = sphi 0, %s173
      %s193 = sphi 0, %s195
      %s196 = sphi 0, %s193
      %s197 = sphi 0, %s196
      %s213 = sphi 0, %s197
    $region4: #{tpu_custom_call.1} parent=1 // loop_header_branch
      %20 = sbr.rel (%p18) target = $region8
    $region5: #{tpu_custom_call.1} parent=1 // loop_body
      %s22 = ssub.s32 %s17, 1
      %s23 = ssub.s32 %s17, 2
      %s30 = sadd.s32 1, %s25
      %p31 = scmp.ge.s32.totalorder %s30, 1
      %s32 = scalar_select %p31, 0, %s30
      %s33 = sadd.s32 1, %s24
      %s34 = scalar_select %p31, %s33, %s24
      %p35 = scmp.ge.s32.totalorder %s34, 2
      %s36 = scalar_select %p35, 0, %s34
      %s37 = ssub.s32 %s24, %s36
      %s38 = ssub.s32 %s25, %s32
      %s39 = sor.u32 %s37, %s38
      %p40 = scmp.eq.s32.totalorder %s39, 0
      %s42 = sadd.s32 %s41, 1
      %s43 = scalar_select %p40, %s41, %s42
      %p46 = pneg %p40
      %p47 = scmp.eq.s32.totalorder %s17, 1
      %p48 = por %p46, %p47
      %p49 = scmp.ne.s32.totalorder %s41, %s44
      %p50 = scmp.eq.s32.totalorder %s17, 0
      %p51 = por %p49, %p50
      %p52 = scmp.ne.s32.totalorder %s41, %s44
      %p53 = scmp.eq.s32.totalorder %s22, 1
      %p54 = por %p52, %p53
      %p55 = scmp.ne.s32.totalorder %s44, %s45
      %p56 = scmp.eq.s32.totalorder %s22, 0
      %p57 = por %p55, %p56
      %p58 = scmp.ne.s32.totalorder %s44, %s45
      %p59 = scmp.eq.s32.totalorder %s23, 1
      %p60 = por %p58, %p59
      %p62 = scmp.ne.s32.totalorder %s45, %s61
      %p63 = scmp.eq.s32.totalorder %s23, 0
      %p64 = por %p62, %p63
      %s66 = sadd.s32 %s65, 1
      %p69 = scmp.eq.s32.totalorder %s17, 1
      %p70 = scmp.ne.s32.totalorder %s65, %s67
      %p71 = scmp.eq.s32.totalorder %s17, 0
      %p72 = por %p70, %p71
      %p73 = scmp.ne.s32.totalorder %s65, %s67
      %p74 = scmp.eq.s32.totalorder %s22, 1
      %p75 = por %p73, %p74
      %p76 = scmp.ne.s32.totalorder %s67, %s68
      %p77 = scmp.eq.s32.totalorder %s22, 0
      %p78 = por %p76, %p77
      %p79 = scmp.ne.s32.totalorder %s67, %s68
      %p80 = scmp.eq.s32.totalorder %s23, 1
      %p81 = por %p79, %p80
      %p83 = scmp.ne.s32.totalorder %s68, %s82
      %p84 = scmp.eq.s32.totalorder %s23, 0
      %p85 = por %p83, %p84
      %s87 = sadd.s32 %s86, 1
      %p90 = scmp.eq.s32.totalorder %s17, 1
      %p91 = scmp.ne.s32.totalorder %s86, %s88
      %p92 = scmp.eq.s32.totalorder %s17, 0
      %p93 = por %p91, %p92
      %p94 = scmp.ne.s32.totalorder %s86, %s88
      %p95 = scmp.eq.s32.totalorder %s22, 1
      %p96 = por %p94, %p95
      %p97 = scmp.ne.s32.totalorder %s88, %s89
      %p98 = scmp.eq.s32.totalorder %s22, 0
      %p99 = por %p97, %p98
      %p100 = scmp.ne.s32.totalorder %s88, %s89
      %p101 = scmp.eq.s32.totalorder %s23, 1
      %p102 = por %p100, %p101
      %p104 = scmp.ne.s32.totalorder %s89, %s103
      %p105 = scmp.eq.s32.totalorder %s23, 0
      %p106 = por %p104, %p105
      %s108 = sadd.s32 %s107, 1
      %p111 = scmp.eq.s32.totalorder %s17, 1
      %p112 = scmp.ne.s32.totalorder %s107, %s109
      %p113 = scmp.eq.s32.totalorder %s17, 0
      %p114 = por %p112, %p113
      %p115 = scmp.ne.s32.totalorder %s107, %s109
      %p116 = scmp.eq.s32.totalorder %s22, 1
      %p117 = por %p115, %p116
      %p118 = scmp.ne.s32.totalorder %s109, %s110
      %p119 = scmp.eq.s32.totalorder %s22, 0
      %p120 = por %p118, %p119
      %p121 = scmp.ne.s32.totalorder %s109, %s110
      %p122 = scmp.eq.s32.totalorder %s23, 1
      %p123 = por %p121, %p122
      %p125 = scmp.ne.s32.totalorder %s110, %s124
      %p126 = scmp.eq.s32.totalorder %s23, 0
      %p127 = por %p125, %p126
      %s129 = sadd.s32 %s128, 1
      %p132 = scmp.eq.s32.totalorder %s17, 1
      %p133 = scmp.ne.s32.totalorder %s128, %s130
      %p134 = scmp.eq.s32.totalorder %s17, 0
      %p135 = por %p133, %p134
      %p136 = scmp.ne.s32.totalorder %s128, %s130
      %p137 = scmp.eq.s32.totalorder %s22, 1
      %p138 = por %p136, %p137
      %p139 = scmp.ne.s32.totalorder %s130, %s131
      %p140 = scmp.eq.s32.totalorder %s22, 0
      %p141 = por %p139, %p140
      %p142 = scmp.ne.s32.totalorder %s130, %s131
      %p143 = scmp.eq.s32.totalorder %s23, 1
      %p144 = por %p142, %p143
      %p146 = scmp.ne.s32.totalorder %s131, %s145
      %p147 = scmp.eq.s32.totalorder %s23, 0
      %p148 = por %p146, %p147
      %s150 = sadd.s32 %s149, 1
      %p153 = scmp.eq.s32.totalorder %s17, 1
      %p154 = scmp.ne.s32.totalorder %s149, %s151
      %p155 = scmp.eq.s32.totalorder %s17, 0
      %p156 = por %p154, %p155
      %p157 = scmp.ne.s32.totalorder %s149, %s151
      %p158 = scmp.eq.s32.totalorder %s22, 1
      %p159 = por %p157, %p158
      %p160 = scmp.ne.s32.totalorder %s151, %s152
      %p161 = scmp.eq.s32.totalorder %s22, 0
      %p162 = por %p160, %p161
      %p163 = scmp.ne.s32.totalorder %s151, %s152
      %p164 = scmp.eq.s32.totalorder %s23, 1
      %p165 = por %p163, %p164
      %p167 = scmp.ne.s32.totalorder %s152, %s166
      %p168 = scmp.eq.s32.totalorder %s23, 0
      %p169 = por %p167, %p168
      %s171 = sadd.s32 %s170, 1
      %p174 = scmp.eq.s32.totalorder %s17, 1
      %p175 = scmp.ne.s32.totalorder %s170, %s172
      %p176 = scmp.eq.s32.totalorder %s17, 0
      %p177 = por %p175, %p176
      %p178 = scmp.ne.s32.totalorder %s170, %s172
      %p179 = scmp.eq.s32.totalorder %s22, 1
      %p180 = por %p178, %p179
      %p181 = scmp.ne.s32.totalorder %s172, %s173
      %p182 = scmp.eq.s32.totalorder %s22, 0
      %p183 = por %p181, %p182
      %p184 = scmp.ne.s32.totalorder %s172, %s173
      %p185 = scmp.eq.s32.totalorder %s23, 1
      %p186 = por %p184, %p185
      %p188 = scmp.ne.s32.totalorder %s173, %s187
      %p189 = scmp.eq.s32.totalorder %s23, 0
      %p190 = por %p188, %p189
      %s191 = ssub.s32 %s24, %s36
      %p192 = scmp.eq.s32.totalorder %s191, 0
      %s194 = sadd.s32 %s193, 1
      %s195 = scalar_select %p192, %s193, %s194
      %p198 = pneg %p192
      %p199 = scmp.eq.s32.totalorder %s17, 1
      %p200 = por %p198, %p199
      %p201 = scmp.ne.s32.totalorder %s193, %s196
      %p202 = scmp.eq.s32.totalorder %s17, 0
      %p203 = por %p201, %p202
      %p204 = scmp.ne.s32.totalorder %s193, %s196
      %p205 = scmp.eq.s32.totalorder %s22, 1
      %p206 = por %p204, %p205
      %p207 = scmp.ne.s32.totalorder %s196, %s197
      %p208 = scmp.eq.s32.totalorder %s22, 0
      %p209 = por %p207, %p208
      %p210 = scmp.ne.s32.totalorder %s196, %s197
      %p211 = scmp.eq.s32.totalorder %s23, 1
      %p212 = por %p210, %p211
      %p214 = scmp.ne.s32.totalorder %s197, %s213
      %p215 = scmp.eq.s32.totalorder %s23, 0
      %p216 = por %p214, %p215
      %p217 = scmp.le.s32.totalorder 1, %s17
      %p218 = scmp.lt.s32.totalorder %s17, 3
      %p219 = pnand %p217, %p218
      %p220 = pneg %p219
      // Predicated region
      $region9: #{tpu_custom_call.1} parent=5 // pred_check
        _
      $region10: #{tpu_custom_call.1} parent=5 // pred_check_branch
        %222 = sbr.rel (%p219) target = $region12
      $region11: #{tpu_custom_call.1} parent=5 // pred_region
        %s223 = ssub.s32 %s17, 1
        // Predicated region
        $region13: #{tpu_custom_call.1} parent=11 // pred_check
          %p224 = pneg %p78
        $region14: #{tpu_custom_call.1} parent=11 // pred_check_branch
          %226 = sbr.rel (%p224) target = $region16
        $region15: #{tpu_custom_call.1} parent=11 // pred_region
          _
        $region16: #{tpu_custom_call.1} parent=11 // pred_fallthru
          _
        // Predicated region
        $region17: #{tpu_custom_call.1} parent=11 // pred_check
          %p227 = pneg %p99
        $region18: #{tpu_custom_call.1} parent=11 // pred_check_branch
          %229 = sbr.rel (%p227) target = $region20
        $region19: #{tpu_custom_call.1} parent=11 // pred_region
          _
        $region20: #{tpu_custom_call.1} parent=11 // pred_fallthru
          _
        // Predicated region
        $region21: #{tpu_custom_call.1} parent=11 // pred_check
          %p230 = pneg %p120
        $region22: #{tpu_custom_call.1} parent=11 // pred_check_branch
          %232 = sbr.rel (%p230) target = $region24
        $region23: #{tpu_custom_call.1} parent=11 // pred_region
          _
        $region24: #{tpu_custom_call.1} parent=11 // pred_fallthru
          _
        // Predicated region
        $region25: #{tpu_custom_call.1} parent=11 // pred_check
          %p233 = pneg %p141
        $region26: #{tpu_custom_call.1} parent=11 // pred_check_branch
          %235 = sbr.rel (%p233) target = $region28
        $region27: #{tpu_custom_call.1} parent=11 // pred_region
          _
        $region28: #{tpu_custom_call.1} parent=11 // pred_fallthru
          _
        // Predicated region
        $region29: #{tpu_custom_call.1} parent=11 // pred_check
          %p236 = pneg %p162
        $region30: #{tpu_custom_call.1} parent=11 // pred_check_branch
          %238 = sbr.rel (%p236) target = $region32
        $region31: #{tpu_custom_call.1} parent=11 // pred_region
          %s240 = ssub.s32 8192, 8192
          %241 = vsyncadd [#allocation3], %s240
          %s242 = sshll.u32 [#allocation2], 4
          %s243 = int_to_ptr.vmem [resolvable:$true] %s242
          %248 = dma.hbm_to_vmem [thread:$0]  %s5, 8192, %s243, [#allocation3], 512, 512, 32
        $region32: #{tpu_custom_call.1} parent=11 // pred_fallthru
          _
        // Predicated region
        $region33: #{tpu_custom_call.1} parent=11 // pred_check
          %p249 = pneg %p183
        $region34: #{tpu_custom_call.1} parent=11 // pred_check_branch
          %251 = sbr.rel (%p249) target = $region36
        $region35: #{tpu_custom_call.1} parent=11 // pred_region
          _
        $region36: #{tpu_custom_call.1} parent=11 // pred_fallthru
          _
      $region12: #{tpu_custom_call.1} parent=5 // pred_fallthru
        _
      %p252 = scmp.lt.s32.totalorder %s17, 2
      // Predicated region
      $region37: #{tpu_custom_call.1} parent=5 // pred_check
        %p253 = pneg %p252
      $region38: #{tpu_custom_call.1} parent=5 // pred_check_branch
        %255 = sbr.rel (%p253) target = $region40
      $region39: #{tpu_custom_call.1} parent=5 // pred_region
        // Predicated region
        $region41: #{tpu_custom_call.1} parent=39 // pred_check
          %p256 = pneg %p51
        $region42: #{tpu_custom_call.1} parent=39 // pred_check_branch
          %258 = sbr.rel (%p256) target = $region44
        $region43: #{tpu_custom_call.1} parent=39 // pred_region
          %s259 = smul.u32 2, %s25
          %p260 = scmp.lt.s32.totalorder %s24, 1
          %s261 = scalar_select %p260, %s24, 1
          %p262 = scmp.lt.s32.totalorder %s259, 1
          %s263 = scalar_select %p262, %s259, 1
          %s264 = smul.addr %s261, 2
          %s265 = sadd.s32 %s263, %s264
          %s266 = smul.addr %s265, 8
          %s267 = scalar_lea.vmem %s0, %s266
          %s268 = smul.u32 2, %s25
        $region44: #{tpu_custom_call.1} parent=39 // pred_fallthru
          _
      $region40: #{tpu_custom_call.1} parent=5 // pred_fallthru
        _
      %p269 = scmp.le.s32.totalorder 1, %s17
      %p270 = scmp.lt.s32.totalorder %s17, 3
      %p271 = pnand %p269, %p270
      %p272 = pneg %p271
      // Predicated region
      $region45: #{tpu_custom_call.1} parent=5 // pred_check
        _
      $region46: #{tpu_custom_call.1} parent=5 // pred_check_branch
        %274 = sbr.rel (%p271) target = $region48
      $region47: #{tpu_custom_call.1} parent=5 // pred_region
        %s275 = ssub.s32 %s17, 1
        // Predicated region
        $region49: #{tpu_custom_call.1} parent=47 // pred_check
          %p276 = pneg %p162
        $region50: #{tpu_custom_call.1} parent=47 // pred_check_branch
          %278 = sbr.rel (%p276) target = $region52
        $region51: #{tpu_custom_call.1} parent=47 // pred_region
          %279 = dma.done [#allocation3], 8192
        $region52: #{tpu_custom_call.1} parent=47 // pred_fallthru
          _
        %s280 = smul.u32 2, %s27
        %p281 = scmp.lt.s32.totalorder %s26, 1
        %s282 = scalar_select %p281, %s26, 1
        %p283 = scmp.lt.s32.totalorder %s280, 1
        %s284 = scalar_select %p283, %s280, 1
        %s285 = smul.addr %s282, 2
        %s286 = sadd.s32 %s284, %s285
        %s287 = smul.addr %s286, 8
        %s288 = scalar_lea.vmem %s0, %s287
        %p289 = pneg %p57
        %p290 = pneg %p54
        %p291 = pneg %p78
        %p292 = pneg %p75
        %p293 = pneg %p99
        %p294 = pneg %p96
        %p295 = pneg %p120
        %p296 = pneg %p117
        %p297 = pneg %p141
        %p298 = pneg %p138
        %p299 = pneg %p162
        %p300 = pneg %p159
        %p301 = pneg %p183
        %p302 = pneg %p180
        %p303 = pneg %p209
        %p304 = pneg %p206
        %s305 = sand.u32 %s196, 1
        %s306 = scalar_lea.sflag [#allocation4], %s305
        %s307 = sand.u32 %s196, 1
        %s308 = smul.addr %s307, 8
        %s309 = scalar_lea.vmem [#allocation5], %s308
        %s310 = smul.u32 2, %s27
        %p311 = scmp.lt.s32.totalorder %s26, 1
        %s312 = scalar_select %p311, %s26, 1
        %p313 = scmp.lt.s32.totalorder %s310, 1
        %s314 = scalar_select %p313, %s310, 1
        %s315 = smul.addr %s312, 2
        %s316 = sadd.s32 %s314, %s315
        %s317 = smul.addr %s316, 8
        %s318 = scalar_lea.vmem %s0, %s317
        %s319 = smul.u32 2, %s27
        %v321 = vld [vmem:[%s318] sm:$0xff]
        %v322 = vld [vmem:[%s318 + $0x8] sm:$0xff]
        %v323 = vld [vmem:[%s1] sm:$0x7]
        %325 = vset.pattern.permute.xlu0 0
        %326 = vperm.xlu0 %325, %v321
        %v327 = vpop.permute.xlu0 %326
        %330 = vset.pattern.permute.xlu0 0
        %331 = vperm.xlu0 %330, %v322
        %v332 = vpop.permute.xlu0 %331
        %v334 = vlaneseq
        %v335 = vshrl.u32 %v334, 7
        %v336 = vsub.s32 0, %v335
        %v337 = vrot.slane %v323, %v336
        %v338 = vmul.f32 %v327, %v337
        %v339 = vmul.f32 %v332, %v337
        %340 = vset.pattern.permute.xlu0 1
        %341 = vperm.xlu0 %340, %v321
        %v342 = vpop.permute.xlu0 %341
        %344 = vset.pattern.permute.xlu0 1
        %345 = vperm.xlu0 %344, %v322
        %v346 = vpop.permute.xlu0 %345
        %v348 = vlaneseq
        %v349 = vshrl.u32 %v348, 7
        %v350 = vsub.s32 1, %v349
        %v351 = vrot.slane %v323, %v350
        %v352 = vmul.f32 %v342, %v351
        %v353 = vmul.f32 %v346, %v351
        %v354 = vadd.f32 %v338, %v352
        %v355 = vadd.f32 %v339, %v353
        %356 = vset.pattern.permute.xlu0 2
        %357 = vperm.xlu0 %356, %v321
        %v358 = vpop.permute.xlu0 %357
        %360 = vset.pattern.permute.xlu0 2
        %361 = vperm.xlu0 %360, %v322
        %v362 = vpop.permute.xlu0 %361
        %v364 = vlaneseq
        %v365 = vshrl.u32 %v364, 7
        %v366 = vsub.s32 2, %v365
        %v367 = vrot.slane %v323, %v366
        %v368 = vmul.f32 %v358, %v367
        %v369 = vmul.f32 %v362, %v367
        %v370 = vadd.f32 %v354, %v368
        %v371 = vadd.f32 %v355, %v369
        %v372 = vld [vmem:[%s2] sm:$0x1]
        %v374 = vlaneseq
        %v375 = vshrl.u32 %v374, 7
        %v376 = vsub.s32 0, %v375
        %v377 = vrot.slane %v372, %v376
        %v379 = vadd.f32 %v370, %v377
        %v380 = vadd.f32 %v371, %v377
        %v381 = vmax.f32 %v379, 0.0
        %v382 = vmax.f32 %v380, 0.0
        %v383 = vpack.c.bf16 %v382, %v381
        %v384 = vld [vmem:[%s3] sm:$0xf]
        %v385 = vld [vmem:[%s3 + $0x4] sm:$0xf]
        %v386 = vld [vmem:[%s3 + $0x8] sm:$0xf]
        %v387 = vld [vmem:[%s3 + $0xc] sm:$0xf]
        %v388 = vld [vmem:[%s3 + $0x10] sm:$0xf]
        %v389 = vld [vmem:[%s3 + $0x14] sm:$0xf]
        %v390 = vld [vmem:[%s3 + $0x18] sm:$0xf]
        %v391 = vld [vmem:[%s3 + $0x1c] sm:$0xf]
        %v392 = vld [vmem:[%s4] sm:$0x1]
        %v394 = vlaneseq
        %v395 = vshrl.u32 %v394, 7
        %v396 = vsub.s32 0, %v395
        %v397 = vrot.slane %v392, %v396
        %v407 = vunpack.c.l.b16 %v384
        %v408 = vunpack.c.l.b16 %v385
        %v409 = vunpack.c.l.b16 %v386
        %v410 = vunpack.c.l.b16 %v387
        %v411 = vunpack.c.l.b16 %v388
        %v412 = vunpack.c.l.b16 %v389
        %v413 = vunpack.c.l.b16 %v390
        %v414 = vunpack.c.l.b16 %v391
        %v415 = vpack.c.b16 %v408, %v407
        %v416 = vpack.c.b16 %v410, %v409
        %v417 = vpack.c.b16 %v412, %v411
        %v418 = vpack.c.b16 %v414, %v413
        %vm423 = vcmask 523264
        %v425 = vsel %vm423, %v383, 0
        %427 = vmatprep.subr.bf16.mxu0 0
        %428 = vmatpush1.bf16.msra.mxu0 %v415
        %429 = vmatprep.subr.bf16.mxu0 0
        %430 = vmatpush1.bf16.msra.mxu0 %v416
        %431 = vmatprep.subr.bf16.mxu0 0
        %432 = vmatpush1.bf16.msra.mxu0 %v417
        %433 = vmatprep.subr.bf16.mxu0 0
        %434 = vmatpush1.bf16.msra.mxu0 %v418
        %435 = vmatprep.subr.bf16.mxu0 0
        %436 = vmatpush1.bf16.msra.mxu0 0
        %437 = vmatprep.subr.bf16.mxu0 0
        %438 = vmatpush1.bf16.msra.mxu0 0
        %439 = vmatprep.subr.bf16.mxu0 0
        %440 = vmatpush1.bf16.msra.mxu0 0
        %441 = vmatprep.subr.bf16.mxu0 0
        %442 = vmatpush1.bf16.msra.mxu0 0
        %443 = vmatprep.subr.bf16.mxu0 0
        %444 = vmatpush1.bf16.msra.mxu0 0
        %445 = vmatprep.subr.bf16.mxu0 0
        %446 = vmatpush1.bf16.msra.mxu0 0
        %447 = vmatprep.subr.bf16.mxu0 0
        %448 = vmatpush1.bf16.msra.mxu0 0
        %449 = vmatprep.subr.bf16.mxu0 0
        %450 = vmatpush1.bf16.msra.mxu0 0
        %451 = vmatprep.subr.bf16.mxu0 0
        %452 = vmatpush1.bf16.msra.mxu0 0
        %453 = vmatprep.subr.bf16.mxu0 0
        %454 = vmatpush1.bf16.msra.mxu0 0
        %455 = vmatprep.subr.bf16.mxu0 0
        %456 = vmatpush1.bf16.msra.mxu0 0
        %457 = vmatprep.subr.bf16.mxu0 0
        %458 = vmatpush1.bf16.msra.mxu0 0
        %459 = vmatprep.mubr.bf16.mxu0 0
        %460 = vmatmul.mubr.bf16.gmra.mrb[0].mxu0 %v425
        %v461 = vpop.f32.mrb[0].mxu0
        %v462 = vadd.f32 %v397, %v461
        %v463 = vpop.f32.mrb[0].mxu0
        %v464 = vpop.f32.mrb[0].mxu0
        %v465 = vadd.f32 %v397, %v464
        %v466 = vpop.f32.mrb[0].mxu0
        %467 = vdwg.mxu0
        %v468 = vmax.f32 %v462, 0.0
        %v469 = vmax.f32 %v465, 0.0
        %v470 = vpack.c.bf16 %v469, %v468
        %v471 = vld [vmem:[#allocation2] sm:$0xff]
        %v472 = vld [vmem:[#allocation2 + $0x8] sm:$0xff]
        %v473 = vld [vmem:[#allocation2 + $0x10] sm:$0xff]
        %v474 = vld [vmem:[#allocation2 + $0x18] sm:$0xff]
        %v475 = vld [vmem:[#allocation2 + $0x20] sm:$0xff]
        %v476 = vld [vmem:[#allocation2 + $0x28] sm:$0xff]
        %v477 = vld [vmem:[#allocation2 + $0x30] sm:$0xff]
        %v478 = vld [vmem:[#allocation2 + $0x38] sm:$0xff]
        %v479 = vld [vmem:[#allocation2 + $0x40] sm:$0xff]
        %v480 = vld [vmem:[#allocation2 + $0x48] sm:$0xff]
        %v481 = vld [vmem:[#allocation2 + $0x50] sm:$0xff]
        %v482 = vld [vmem:[#allocation2 + $0x58] sm:$0xff]
        %v483 = vld [vmem:[#allocation2 + $0x60] sm:$0xff]
        %v484 = vld [vmem:[#allocation2 + $0x68] sm:$0xff]
        %v485 = vld [vmem:[#allocation2 + $0x70] sm:$0xff]
        %v486 = vld [vmem:[#allocation2 + $0x78] sm:$0xff]
        %v487 = vld [vmem:[#allocation2 + $0x80] sm:$0xff]
        %v488 = vld [vmem:[#allocation2 + $0x88] sm:$0xff]
        %v489 = vld [vmem:[#allocation2 + $0x90] sm:$0xff]
        %v490 = vld [vmem:[#allocation2 + $0x98] sm:$0xff]
        %v491 = vld [vmem:[#allocation2 + $0xa0] sm:$0xff]
        %v492 = vld [vmem:[#allocation2 + $0xa8] sm:$0xff]
        %v493 = vld [vmem:[#allocation2 + $0xb0] sm:$0xff]
        %v494 = vld [vmem:[#allocation2 + $0xb8] sm:$0xff]
        %v495 = vld [vmem:[#allocation2 + $0xc0] sm:$0xff]
        %v496 = vld [vmem:[#allocation2 + $0xc8] sm:$0xff]
        %v497 = vld [vmem:[#allocation2 + $0xd0] sm:$0xff]
        %v498 = vld [vmem:[#allocation2 + $0xd8] sm:$0xff]
        %v499 = vld [vmem:[#allocation2 + $0xe0] sm:$0xff]
        %v500 = vld [vmem:[#allocation2 + $0xe8] sm:$0xff]
        %v501 = vld [vmem:[#allocation2 + $0xf0] sm:$0xff]
        %v502 = vld [vmem:[#allocation2 + $0xf8] sm:$0xff]
        %v503 = vld [vmem:[#allocation2 + $0x100] sm:$0xff]
        %v504 = vld [vmem:[#allocation2 + $0x108] sm:$0xff]
        %v505 = vld [vmem:[#allocation2 + $0x110] sm:$0xff]
        %v506 = vld [vmem:[#allocation2 + $0x118] sm:$0xff]
        %v507 = vld [vmem:[#allocation2 + $0x120] sm:$0xff]
        %v508 = vld [vmem:[#allocation2 + $0x128] sm:$0xff]
        %v509 = vld [vmem:[#allocation2 + $0x130] sm:$0xff]
        %v510 = vld [vmem:[#allocation2 + $0x138] sm:$0xff]
        %v511 = vld [vmem:[#allocation2 + $0x140] sm:$0xff]
        %v512 = vld [vmem:[#allocation2 + $0x148] sm:$0xff]
        %v513 = vld [vmem:[#allocation2 + $0x150] sm:$0xff]
        %v514 = vld [vmem:[#allocation2 + $0x158] sm:$0xff]
        %v515 = vld [vmem:[#allocation2 + $0x160] sm:$0xff]
        %v516 = vld [vmem:[#allocation2 + $0x168] sm:$0xff]
        %v517 = vld [vmem:[#allocation2 + $0x170] sm:$0xff]
        %v518 = vld [vmem:[#allocation2 + $0x178] sm:$0xff]
        %v519 = vld [vmem:[#allocation2 + $0x180] sm:$0xff]
        %v520 = vld [vmem:[#allocation2 + $0x188] sm:$0xff]
        %v521 = vld [vmem:[#allocation2 + $0x190] sm:$0xff]
        %v522 = vld [vmem:[#allocation2 + $0x198] sm:$0xff]
        %v523 = vld [vmem:[#allocation2 + $0x1a0] sm:$0xff]
        %v524 = vld [vmem:[#allocation2 + $0x1a8] sm:$0xff]
        %v525 = vld [vmem:[#allocation2 + $0x1b0] sm:$0xff]
        %v526 = vld [vmem:[#allocation2 + $0x1b8] sm:$0xff]
        %v527 = vld [vmem:[#allocation2 + $0x1c0] sm:$0xff]
        %v528 = vld [vmem:[#allocation2 + $0x1c8] sm:$0xff]
        %v529 = vld [vmem:[#allocation2 + $0x1d0] sm:$0xff]
        %v530 = vld [vmem:[#allocation2 + $0x1d8] sm:$0xff]
        %v531 = vld [vmem:[#allocation2 + $0x1e0] sm:$0xff]
        %v532 = vld [vmem:[#allocation2 + $0x1e8] sm:$0xff]
        %v533 = vld [vmem:[#allocation2 + $0x1f0] sm:$0xff]
        %v534 = vld [vmem:[#allocation2 + $0x1f8] sm:$0xff]
        %v535 = vld [vmem:[%s6] sm:$0xff]
        %v537 = vlaneseq
        %v538 = vshrl.u32 %v537, 7
        %v539 = vsub.s32 0, %v538
        %v540 = vrot.slane %v535, %v539
        %v541 = vlaneseq
        %v542 = vshrl.u32 %v541, 7
        %v543 = vsub.s32 1, %v542
        %v544 = vrot.slane %v535, %v543
        %v545 = vlaneseq
        %v546 = vshrl.u32 %v545, 7
        %v547 = vsub.s32 2, %v546
        %v548 = vrot.slane %v535, %v547
        %v549 = vlaneseq
        %v550 = vshrl.u32 %v549, 7
        %v551 = vsub.s32 3, %v550
        %v552 = vrot.slane %v535, %v551
        %v553 = vlaneseq
        %v554 = vshrl.u32 %v553, 7
        %v555 = vsub.s32 4, %v554
        %v556 = vrot.slane %v535, %v555
        %v557 = vlaneseq
        %v558 = vshrl.u32 %v557, 7
        %v559 = vsub.s32 5, %v558
        %v560 = vrot.slane %v535, %v559
        %v561 = vlaneseq
        %v562 = vshrl.u32 %v561, 7
        %v563 = vsub.s32 6, %v562
        %v564 = vrot.slane %v535, %v563
        %v565 = vlaneseq
        %v566 = vshrl.u32 %v565, 7
        %v567 = vsub.s32 7, %v566
        %v568 = vrot.slane %v535, %v567
        %v641 = vunpack.c.l.b16 %v471
        %v642 = vunpack.c.h.b16 %v471
        %v643 = vunpack.c.l.b16 %v472
        %v644 = vunpack.c.h.b16 %v472
        %v645 = vunpack.c.l.b16 %v473
        %v646 = vunpack.c.h.b16 %v473
        %v647 = vunpack.c.l.b16 %v474
        %v648 = vunpack.c.h.b16 %v474
        %v649 = vunpack.c.l.b16 %v475
        %v650 = vunpack.c.h.b16 %v475
        %v651 = vunpack.c.l.b16 %v476
        %v652 = vunpack.c.h.b16 %v476
        %v653 = vunpack.c.l.b16 %v477
        %v654 = vunpack.c.h.b16 %v477
        %v655 = vunpack.c.l.b16 %v478
        %v656 = vunpack.c.h.b16 %v478
        %v657 = vunpack.c.l.b16 %v479
        %v658 = vunpack.c.h.b16 %v479
        %v659 = vunpack.c.l.b16 %v480
        %v660 = vunpack.c.h.b16 %v480
        %v661 = vunpack.c.l.b16 %v481
        %v662 = vunpack.c.h.b16 %v481
        %v663 = vunpack.c.l.b16 %v482
        %v664 = vunpack.c.h.b16 %v482
        %v665 = vunpack.c.l.b16 %v483
        %v666 = vunpack.c.h.b16 %v483
        %v667 = vunpack.c.l.b16 %v484
        %v668 = vunpack.c.h.b16 %v484
        %v669 = vunpack.c.l.b16 %v485
        %v670 = vunpack.c.h.b16 %v485
        %v671 = vunpack.c.l.b16 %v486
        %v672 = vunpack.c.h.b16 %v486
        %v673 = vunpack.c.l.b16 %v487
        %v674 = vunpack.c.h.b16 %v487
        %v675 = vunpack.c.l.b16 %v488
        %v676 = vunpack.c.h.b16 %v488
        %v677 = vunpack.c.l.b16 %v489
        %v678 = vunpack.c.h.b16 %v489
        %v679 = vunpack.c.l.b16 %v490
        %v680 = vunpack.c.h.b16 %v490
        %v681 = vunpack.c.l.b16 %v491
        %v682 = vunpack.c.h.b16 %v491
        %v683 = vunpack.c.l.b16 %v492
        %v684 = vunpack.c.h.b16 %v492
        %v685 = vunpack.c.l.b16 %v493
        %v686 = vunpack.c.h.b16 %v493
        %v687 = vunpack.c.l.b16 %v494
        %v688 = vunpack.c.h.b16 %v494
        %v689 = vunpack.c.l.b16 %v495
        %v690 = vunpack.c.h.b16 %v495
        %v691 = vunpack.c.l.b16 %v496
        %v692 = vunpack.c.h.b16 %v496
        %v693 = vunpack.c.l.b16 %v497
        %v694 = vunpack.c.h.b16 %v497
        %v695 = vunpack.c.l.b16 %v498
        %v696 = vunpack.c.h.b16 %v498
        %v697 = vunpack.c.l.b16 %v499
        %v698 = vunpack.c.h.b16 %v499
        %v699 = vunpack.c.l.b16 %v500
        %v700 = vunpack.c.h.b16 %v500
        %v701 = vunpack.c.l.b16 %v501
        %v702 = vunpack.c.h.b16 %v501
        %v703 = vunpack.c.l.b16 %v502
        %v704 = vunpack.c.h.b16 %v502
        %v705 = vunpack.c.l.b16 %v503
        %v706 = vunpack.c.h.b16 %v503
        %v707 = vunpack.c.l.b16 %v504
        %v708 = vunpack.c.h.b16 %v504
        %v709 = vunpack.c.l.b16 %v505
        %v710 = vunpack.c.h.b16 %v505
        %v711 = vunpack.c.l.b16 %v506
        %v712 = vunpack.c.h.b16 %v506
        %v713 = vunpack.c.l.b16 %v507
        %v714 = vunpack.c.h.b16 %v507
        %v715 = vunpack.c.l.b16 %v508
        %v716 = vunpack.c.h.b16 %v508
        %v717 = vunpack.c.l.b16 %v509
        %v718 = vunpack.c.h.b16 %v509
        %v719 = vunpack.c.l.b16 %v510
        %v720 = vunpack.c.h.b16 %v510
        %v721 = vunpack.c.l.b16 %v511
        %v722 = vunpack.c.h.b16 %v511
        %v723 = vunpack.c.l.b16 %v512
        %v724 = vunpack.c.h.b16 %v512
        %v725 = vunpack.c.l.b16 %v513
        %v726 = vunpack.c.h.b16 %v513
        %v727 = vunpack.c.l.b16 %v514
        %v728 = vunpack.c.h.b16 %v514
        %v729 = vunpack.c.l.b16 %v515
        %v730 = vunpack.c.h.b16 %v515
        %v731 = vunpack.c.l.b16 %v516
        %v732 = vunpack.c.h.b16 %v516
        %v733 = vunpack.c.l.b16 %v517
        %v734 = vunpack.c.h.b16 %v517
        %v735 = vunpack.c.l.b16 %v518
        %v736 = vunpack.c.h.b16 %v518
        %v737 = vunpack.c.l.b16 %v519
        %v738 = vunpack.c.h.b16 %v519
        %v739 = vunpack.c.l.b16 %v520
        %v740 = vunpack.c.h.b16 %v520
        %v741 = vunpack.c.l.b16 %v521
        %v742 = vunpack.c.h.b16 %v521
        %v743 = vunpack.c.l.b16 %v522
        %v744 = vunpack.c.h.b16 %v522
        %v745 = vunpack.c.l.b16 %v523
        %v746 = vunpack.c.h.b16 %v523
        %v747 = vunpack.c.l.b16 %v524
        %v748 = vunpack.c.h.b16 %v524
        %v749 = vunpack.c.l.b16 %v525
        %v750 = vunpack.c.h.b16 %v525
        %v751 = vunpack.c.l.b16 %v526
        %v752 = vunpack.c.h.b16 %v526
        %v753 = vunpack.c.l.b16 %v527
        %v754 = vunpack.c.h.b16 %v527
        %v755 = vunpack.c.l.b16 %v528
        %v756 = vunpack.c.h.b16 %v528
        %v757 = vunpack.c.l.b16 %v529
        %v758 = vunpack.c.h.b16 %v529
        %v759 = vunpack.c.l.b16 %v530
        %v760 = vunpack.c.h.b16 %v530
        %v761 = vunpack.c.l.b16 %v531
        %v762 = vunpack.c.h.b16 %v531
        %v763 = vunpack.c.l.b16 %v532
        %v764 = vunpack.c.h.b16 %v532
        %v765 = vunpack.c.l.b16 %v533
        %v766 = vunpack.c.h.b16 %v533
        %v767 = vunpack.c.l.b16 %v534
        %v768 = vunpack.c.h.b16 %v534
        %v769 = vpack.c.b16 %v649, %v641
        %v770 = vpack.c.b16 %v650, %v642
        %v771 = vpack.c.b16 %v651, %v643
        %v772 = vpack.c.b16 %v652, %v644
        %v773 = vpack.c.b16 %v653, %v645
        %v774 = vpack.c.b16 %v654, %v646
        %v775 = vpack.c.b16 %v655, %v647
        %v776 = vpack.c.b16 %v656, %v648
        %v777 = vpack.c.b16 %v665, %v657
        %v778 = vpack.c.b16 %v666, %v658
        %v779 = vpack.c.b16 %v667, %v659
        %v780 = vpack.c.b16 %v668, %v660
        %v781 = vpack.c.b16 %v669, %v661
        %v782 = vpack.c.b16 %v670, %v662
        %v783 = vpack.c.b16 %v671, %v663
        %v784 = vpack.c.b16 %v672, %v664
        %v785 = vpack.c.b16 %v681, %v673
        %v786 = vpack.c.b16 %v682, %v674
        %v787 = vpack.c.b16 %v683, %v675
        %v788 = vpack.c.b16 %v684, %v676
        %v789 = vpack.c.b16 %v685, %v677
        %v790 = vpack.c.b16 %v686, %v678
        %v791 = vpack.c.b16 %v687, %v679
        %v792 = vpack.c.b16 %v688, %v680
        %v793 = vpack.c.b16 %v697, %v689
        %v794 = vpack.c.b16 %v698, %v690
        %v795 = vpack.c.b16 %v699, %v691
        %v796 = vpack.c.b16 %v700, %v692
        %v797 = vpack.c.b16 %v701, %v693
        %v798 = vpack.c.b16 %v702, %v694
        %v799 = vpack.c.b16 %v703, %v695
        %v800 = vpack.c.b16 %v704, %v696
        %v801 = vpack.c.b16 %v713, %v705
        %v802 = vpack.c.b16 %v714, %v706
        %v803 = vpack.c.b16 %v715, %v707
        %v804 = vpack.c.b16 %v716, %v708
        %v805 = vpack.c.b16 %v717, %v709
        %v806 = vpack.c.b16 %v718, %v710
        %v807 = vpack.c.b16 %v719, %v711
        %v808 = vpack.c.b16 %v720, %v712
        %v809 = vpack.c.b16 %v729, %v721
        %v810 = vpack.c.b16 %v730, %v722
        %v811 = vpack.c.b16 %v731, %v723
        %v812 = vpack.c.b16 %v732, %v724
        %v813 = vpack.c.b16 %v733, %v725
        %v814 = vpack.c.b16 %v734, %v726
        %v815 = vpack.c.b16 %v735, %v727
        %v816 = vpack.c.b16 %v736, %v728
        %v817 = vpack.c.b16 %v745, %v737
        %v818 = vpack.c.b16 %v746, %v738
        %v819 = vpack.c.b16 %v747, %v739
        %v820 = vpack.c.b16 %v748, %v740
        %v821 = vpack.c.b16 %v749, %v741
        %v822 = vpack.c.b16 %v750, %v742
        %v823 = vpack.c.b16 %v751, %v743
        %v824 = vpack.c.b16 %v752, %v744
        %v825 = vpack.c.b16 %v761, %v753
        %v826 = vpack.c.b16 %v762, %v754
        %v827 = vpack.c.b16 %v763, %v755
        %v828 = vpack.c.b16 %v764, %v756
        %v829 = vpack.c.b16 %v765, %v757
        %v830 = vpack.c.b16 %v766, %v758
        %v831 = vpack.c.b16 %v767, %v759
        %v832 = vpack.c.b16 %v768, %v760
        %897 = vmatprep.subr.bf16.mxu0 %v770
        %898 = vmatpush1.bf16.msra.mxu0 %v769
        %899 = vmatprep.subr.bf16.mxu0 %v778
        %900 = vmatpush1.bf16.msra.mxu0 %v777
        %901 = vmatprep.subr.bf16.mxu0 %v786
        %902 = vmatpush1.bf16.msra.mxu0 %v785
        %903 = vmatprep.subr.bf16.mxu0 %v794
        %904 = vmatpush1.bf16.msra.mxu0 %v793
        %905 = vmatprep.subr.bf16.mxu0 %v802
        %906 = vmatpush1.bf16.msra.mxu0 %v801
        %907 = vmatprep.subr.bf16.mxu0 %v810
        %908 = vmatpush1.bf16.msra.mxu0 %v809
        %909 = vmatprep.subr.bf16.mxu0 %v818
        %910 = vmatpush1.bf16.msra.mxu0 %v817
        %911 = vmatprep.subr.bf16.mxu0 %v826
        %912 = vmatpush1.bf16.msra.mxu0 %v825
        %913 = vmatprep.subr.bf16.mxu0 0
        %914 = vmatpush1.bf16.msra.mxu0 0
        %915 = vmatprep.subr.bf16.mxu0 0
        %916 = vmatpush1.bf16.msra.mxu0 0
        %917 = vmatprep.subr.bf16.mxu0 0
        %918 = vmatpush1.bf16.msra.mxu0 0
        %919 = vmatprep.subr.bf16.mxu0 0
        %920 = vmatpush1.bf16.msra.mxu0 0
        %921 = vmatprep.subr.bf16.mxu0 0
        %922 = vmatpush1.bf16.msra.mxu0 0
        %923 = vmatprep.subr.bf16.mxu0 0
        %924 = vmatpush1.bf16.msra.mxu0 0
        %925 = vmatprep.subr.bf16.mxu0 0
        %926 = vmatpush1.bf16.msra.mxu0 0
        %927 = vmatprep.subr.bf16.mxu0 0
        %928 = vmatpush1.bf16.msra.mxu0 0
        %929 = vmatprep.mubr.bf16.mxu0 0
        %930 = vmatmul.mubr.bf16.gmra.mrb[0].mxu0 %v470
        %v931 = vpop.f32.mrb[0].mxu0
        %v932 = vadd.f32 %v540, %v931
        %v933 = vpop.f32.mrb[0].mxu0
        %v934 = vadd.f32 %v544, %v933
        %v935 = vpop.f32.mrb[0].mxu0
        %v936 = vadd.f32 %v540, %v935
        %v937 = vpop.f32.mrb[0].mxu0
        %v938 = vadd.f32 %v544, %v937
        %939 = vdwg.mxu0
        %940 = vmatprep.subr.bf16.mxu0 %v772
        %941 = vmatpush1.bf16.msra.mxu0 %v771
        %942 = vmatprep.subr.bf16.mxu0 %v780
        %943 = vmatpush1.bf16.msra.mxu0 %v779
        %944 = vmatprep.subr.bf16.mxu0 %v788
        %945 = vmatpush1.bf16.msra.mxu0 %v787
        %946 = vmatprep.subr.bf16.mxu0 %v796
        %947 = vmatpush1.bf16.msra.mxu0 %v795
        %948 = vmatprep.subr.bf16.mxu0 %v804
        %949 = vmatpush1.bf16.msra.mxu0 %v803
        %950 = vmatprep.subr.bf16.mxu0 %v812
        %951 = vmatpush1.bf16.msra.mxu0 %v811
        %952 = vmatprep.subr.bf16.mxu0 %v820
        %953 = vmatpush1.bf16.msra.mxu0 %v819
        %954 = vmatprep.subr.bf16.mxu0 %v828
        %955 = vmatpush1.bf16.msra.mxu0 %v827
        %956 = vmatprep.subr.bf16.mxu0 0
        %957 = vmatpush1.bf16.msra.mxu0 0
        %958 = vmatprep.subr.bf16.mxu0 0
        %959 = vmatpush1.bf16.msra.mxu0 0
        %960 = vmatprep.subr.bf16.mxu0 0
        %961 = vmatpush1.bf16.msra.mxu0 0
        %962 = vmatprep.subr.bf16.mxu0 0
        %963 = vmatpush1.bf16.msra.mxu0 0
        %964 = vmatprep.subr.bf16.mxu0 0
        %965 = vmatpush1.bf16.msra.mxu0 0
        %966 = vmatprep.subr.bf16.mxu0 0
        %967 = vmatpush1.bf16.msra.mxu0 0
        %968 = vmatprep.subr.bf16.mxu0 0
        %969 = vmatpush1.bf16.msra.mxu0 0
        %970 = vmatprep.subr.bf16.mxu0 0
        %971 = vmatpush1.bf16.msra.mxu0 0
        %972 = vmatprep.mubr.bf16.mxu0 0
        %973 = vmatmul.mubr.bf16.gmra.mrb[0].mxu0 %v470
        %v974 = vpop.f32.mrb[0].mxu0
        %v975 = vadd.f32 %v548, %v974
        %v976 = vpop.f32.mrb[0].mxu0
        %v977 = vadd.f32 %v552, %v976
        %v978 = vpop.f32.mrb[0].mxu0
        %v979 = vadd.f32 %v548, %v978
        %v980 = vpop.f32.mrb[0].mxu0
        %v981 = vadd.f32 %v552, %v980
        %982 = vdwg.mxu0
        %983 = vmatprep.subr.bf16.mxu0 %v774
        %984 = vmatpush1.bf16.msra.mxu0 %v773
        %985 = vmatprep.subr.bf16.mxu0 %v782
        %986 = vmatpush1.bf16.msra.mxu0 %v781
        %987 = vmatprep.subr.bf16.mxu0 %v790
        %988 = vmatpush1.bf16.msra.mxu0 %v789
        %989 = vmatprep.subr.bf16.mxu0 %v798
        %990 = vmatpush1.bf16.msra.mxu0 %v797
        %991 = vmatprep.subr.bf16.mxu0 %v806
        %992 = vmatpush1.bf16.msra.mxu0 %v805
        %993 = vmatprep.subr.bf16.mxu0 %v814
        %994 = vmatpush1.bf16.msra.mxu0 %v813
        %995 = vmatprep.subr.bf16.mxu0 %v822
        %996 = vmatpush1.bf16.msra.mxu0 %v821
        %997 = vmatprep.subr.bf16.mxu0 %v830
        %998 = vmatpush1.bf16.msra.mxu0 %v829
        %999 = vmatprep.subr.bf16.mxu0 0
        %1000 = vmatpush1.bf16.msra.mxu0 0
        %1001 = vmatprep.subr.bf16.mxu0 0
        %1002 = vmatpush1.bf16.msra.mxu0 0
        %1003 = vmatprep.subr.bf16.mxu0 0
        %1004 = vmatpush1.bf16.msra.mxu0 0
        %1005 = vmatprep.subr.bf16.mxu0 0
        %1006 = vmatpush1.bf16.msra.mxu0 0
        %1007 = vmatprep.subr.bf16.mxu0 0
        %1008 = vmatpush1.bf16.msra.mxu0 0
        %1009 = vmatprep.subr.bf16.mxu0 0
        %1010 = vmatpush1.bf16.msra.mxu0 0
        %1011 = vmatprep.subr.bf16.mxu0 0
        %1012 = vmatpush1.bf16.msra.mxu0 0
        %1013 = vmatprep.subr.bf16.mxu0 0
        %1014 = vmatpush1.bf16.msra.mxu0 0
        %1015 = vmatprep.mubr.bf16.mxu0 0
        %1016 = vmatmul.mubr.bf16.gmra.mrb[0].mxu0 %v470
        %v1017 = vpop.f32.mrb[0].mxu0
        %v1018 = vadd.f32 %v556, %v1017
        %v1019 = vpop.f32.mrb[0].mxu0
        %v1020 = vadd.f32 %v560, %v1019
        %v1021 = vpop.f32.mrb[0].mxu0
        %v1022 = vadd.f32 %v556, %v1021
        %v1023 = vpop.f32.mrb[0].mxu0
        %v1024 = vadd.f32 %v560, %v1023
        %1025 = vdwg.mxu0
        %1026 = vmatprep.subr.bf16.mxu0 %v776
        %1027 = vmatpush1.bf16.msra.mxu0 %v775
        %1028 = vmatprep.subr.bf16.mxu0 %v784
        %1029 = vmatpush1.bf16.msra.mxu0 %v783
        %1030 = vmatprep.subr.bf16.mxu0 %v792
        %1031 = vmatpush1.bf16.msra.mxu0 %v791
        %1032 = vmatprep.subr.bf16.mxu0 %v800
        %1033 = vmatpush1.bf16.msra.mxu0 %v799
        %1034 = vmatprep.subr.bf16.mxu0 %v808
        %1035 = vmatpush1.bf16.msra.mxu0 %v807
        %1036 = vmatprep.subr.bf16.mxu0 %v816
        %1037 = vmatpush1.bf16.msra.mxu0 %v815
        %1038 = vmatprep.subr.bf16.mxu0 %v824
        %1039 = vmatpush1.bf16.msra.mxu0 %v823
        %1040 = vmatprep.subr.bf16.mxu0 %v832
        %1041 = vmatpush1.bf16.msra.mxu0 %v831
        %1042 = vmatprep.subr.bf16.mxu0 0
        %1043 = vmatpush1.bf16.msra.mxu0 0
        %1044 = vmatprep.subr.bf16.mxu0 0
        %1045 = vmatpush1.bf16.msra.mxu0 0
        %1046 = vmatprep.subr.bf16.mxu0 0
        %1047 = vmatpush1.bf16.msra.mxu0 0
        %1048 = vmatprep.subr.bf16.mxu0 0
        %1049 = vmatpush1.bf16.msra.mxu0 0
        %1050 = vmatprep.subr.bf16.mxu0 0
        %1051 = vmatpush1.bf16.msra.mxu0 0
        %1052 = vmatprep.subr.bf16.mxu0 0
        %1053 = vmatpush1.bf16.msra.mxu0 0
        %1054 = vmatprep.subr.bf16.mxu0 0
        %1055 = vmatpush1.bf16.msra.mxu0 0
        %1056 = vmatprep.subr.bf16.mxu0 0
        %1057 = vmatpush1.bf16.msra.mxu0 0
        %1058 = vmatprep.mubr.bf16.mxu0 0
        %1059 = vmatmul.mubr.bf16.gmra.mrb[0].mxu0 %v470
        %v1060 = vpop.f32.mrb[0].mxu0
        %v1061 = vadd.f32 %v564, %v1060
        %v1062 = vpop.f32.mrb[0].mxu0
        %v1063 = vadd.f32 %v568, %v1062
        %v1064 = vpop.f32.mrb[0].mxu0
        %v1065 = vadd.f32 %v564, %v1064
        %v1066 = vpop.f32.mrb[0].mxu0
        %v1067 = vadd.f32 %v568, %v1066
        %1068 = vdwg.mxu0
        %v1069 = vmax.f32 %v932, 0.0
        %v1070 = vmax.f32 %v934, 0.0
        %v1071 = vmax.f32 %v975, 0.0
        %v1072 = vmax.f32 %v977, 0.0
        %v1073 = vmax.f32 %v1018, 0.0
        %v1074 = vmax.f32 %v1020, 0.0
        %v1075 = vmax.f32 %v1061, 0.0
        %v1076 = vmax.f32 %v1063, 0.0
        %v1077 = vmax.f32 %v936, 0.0
        %v1078 = vmax.f32 %v938, 0.0
        %v1079 = vmax.f32 %v979, 0.0
        %v1080 = vmax.f32 %v981, 0.0
        %v1081 = vmax.f32 %v1022, 0.0
        %v1082 = vmax.f32 %v1024, 0.0
        %v1083 = vmax.f32 %v1065, 0.0
        %v1084 = vmax.f32 %v1067, 0.0
        %v1085 = vmax.f32 %v1069, %v1077
        %v1086 = vrot.slane %v1085, 4
        %v1087 = vmax.f32 %v1085, %v1086
        %v1088 = vrot.slane %v1087, 2
        %v1089 = vmax.f32 %v1087, %v1088
        %v1090 = vrot.slane %v1089, 1
        %v1091 = vmax.f32 %v1089, %v1090
        %v1092 = vmax.f32 %v1070, %v1078
        %v1093 = vrot.slane %v1092, 4
        %v1094 = vmax.f32 %v1092, %v1093
        %v1095 = vrot.slane %v1094, 2
        %v1096 = vmax.f32 %v1094, %v1095
        %v1097 = vrot.slane %v1096, 1
        %v1098 = vmax.f32 %v1096, %v1097
        %v1099 = vmax.f32 %v1071, %v1079
        %v1100 = vrot.slane %v1099, 4
        %v1101 = vmax.f32 %v1099, %v1100
        %v1102 = vrot.slane %v1101, 2
        %v1103 = vmax.f32 %v1101, %v1102
        %v1104 = vrot.slane %v1103, 1
        %v1105 = vmax.f32 %v1103, %v1104
        %v1106 = vmax.f32 %v1072, %v1080
        %v1107 = vrot.slane %v1106, 4
        %v1108 = vmax.f32 %v1106, %v1107
        %v1109 = vrot.slane %v1108, 2
        %v1110 = vmax.f32 %v1108, %v1109
        %v1111 = vrot.slane %v1110, 1
        %v1112 = vmax.f32 %v1110, %v1111
        %v1113 = vmax.f32 %v1073, %v1081
        %v1114 = vrot.slane %v1113, 4
        %v1115 = vmax.f32 %v1113, %v1114
        %v1116 = vrot.slane %v1115, 2
        %v1117 = vmax.f32 %v1115, %v1116
        %v1118 = vrot.slane %v1117, 1
        %v1119 = vmax.f32 %v1117, %v1118
        %v1120 = vmax.f32 %v1074, %v1082
        %v1121 = vrot.slane %v1120, 4
        %v1122 = vmax.f32 %v1120, %v1121
        %v1123 = vrot.slane %v1122, 2
        %v1124 = vmax.f32 %v1122, %v1123
        %v1125 = vrot.slane %v1124, 1
        %v1126 = vmax.f32 %v1124, %v1125
        %v1127 = vmax.f32 %v1075, %v1083
        %v1128 = vrot.slane %v1127, 4
        %v1129 = vmax.f32 %v1127, %v1128
        %v1130 = vrot.slane %v1129, 2
        %v1131 = vmax.f32 %v1129, %v1130
        %v1132 = vrot.slane %v1131, 1
        %v1133 = vmax.f32 %v1131, %v1132
        %v1134 = vmax.f32 %v1076, %v1084
        %v1135 = vrot.slane %v1134, 4
        %v1136 = vmax.f32 %v1134, %v1135
        %v1137 = vrot.slane %v1136, 2
        %v1138 = vmax.f32 %v1136, %v1137
        %v1139 = vrot.slane %v1138, 1
        %v1140 = vmax.f32 %v1138, %v1139
        %p1141 = scmp.eq.s32.totalorder %s27, 0
        // Predicated region
        $region53: #{tpu_custom_call.1} parent=47 // pred_check
          %p1142 = pneg %p1141
        $region54: #{tpu_custom_call.1} parent=47 // pred_check_branch
          %1144 = sbr.rel (%p1142) target = $region56
        $region55: #{tpu_custom_call.1} parent=47 // pred_region
          %v1153 = vcombine.low %v1091, %v1098
          %v1154 = vcombine.low %v1105, %v1112
          %v1155 = vcombine.low %v1119, %v1126
          %v1156 = vcombine.low %v1133, %v1140
          %v1158 = vunpack.c.l.s4 1966171168
          %v1159 = vunpack.c.0.s8 %v1158
          %v1160 = vlaneseq
          %v1161 = vshrl.u32 %v1160, 7
          %v1162 = vsub.s32 %v1159, %v1161
          %v1163 = vrot.slane %v1153, %v1162
          %v1165 = vunpack.c.l.s4 1966171168
          %v1166 = vunpack.c.0.s8 %v1165
          %v1167 = vlaneseq
          %v1168 = vshrl.u32 %v1167, 7
          %v1169 = vsub.s32 %v1166, %v1168
          %v1170 = vrot.slane %v1154, %v1169
          %v1172 = vunpack.c.l.s4 1966171168
          %v1173 = vunpack.c.0.s8 %v1172
          %v1174 = vlaneseq
          %v1175 = vshrl.u32 %v1174, 7
          %v1176 = vsub.s32 %v1173, %v1175
          %v1177 = vrot.slane %v1155, %v1176
          %v1179 = vunpack.c.l.s4 1966171168
          %v1180 = vunpack.c.0.s8 %v1179
          %v1181 = vlaneseq
          %v1182 = vshrl.u32 %v1181, 7
          %v1183 = vsub.s32 %v1180, %v1182
          %v1184 = vrot.slane %v1156, %v1183
          %v1185 = vcombine.low %v1163, %v1170
          %v1186 = vcombine.low %v1177, %v1184
          %v1188 = vunpack.c.l.s4 1966171168
          %v1189 = vunpack.c.0.s8 %v1188
          %v1190 = vlaneseq
          %v1191 = vshrl.u32 %v1190, 7
          %v1192 = vsub.s32 %v1189, %v1191
          %v1193 = vrot.slane %v1185, %v1192
          %v1195 = vunpack.c.l.s4 1966171168
          %v1196 = vunpack.c.0.s8 %v1195
          %v1197 = vlaneseq
          %v1198 = vshrl.u32 %v1197, 7
          %v1199 = vsub.s32 %v1196, %v1198
          %v1200 = vrot.slane %v1186, %v1199
          %v1201 = vcombine.low %v1193, %v1200
          %1203 = vst [vmem:[%s309] sm:$0xff] %v1201
        $region56: #{tpu_custom_call.1} parent=47 // pred_fallthru
          _
        %p1204 = scmp.gt.s32.totalorder %s27, 0
        // Predicated region
        $region57: #{tpu_custom_call.1} parent=47 // pred_check
          %p1205 = pneg %p1204
        $region58: #{tpu_custom_call.1} parent=47 // pred_check_branch
          %1207 = sbr.rel (%p1205) target = $region60
        $region59: #{tpu_custom_call.1} parent=47 // pred_region
          %v1208 = vld [vmem:[%s309] sm:$0xff]
          %v1217 = vcombine.low %v1091, %v1098
          %v1218 = vcombine.low %v1105, %v1112
          %v1219 = vcombine.low %v1119, %v1126
          %v1220 = vcombine.low %v1133, %v1140
          %v1222 = vunpack.c.l.s4 1966171168
          %v1223 = vunpack.c.0.s8 %v1222
          %v1224 = vlaneseq
          %v1225 = vshrl.u32 %v1224, 7
          %v1226 = vsub.s32 %v1223, %v1225
          %v1227 = vrot.slane %v1217, %v1226
          %v1229 = vunpack.c.l.s4 1966171168
          %v1230 = vunpack.c.0.s8 %v1229
          %v1231 = vlaneseq
          %v1232 = vshrl.u32 %v1231, 7
          %v1233 = vsub.s32 %v1230, %v1232
          %v1234 = vrot.slane %v1218, %v1233
          %v1236 = vunpack.c.l.s4 1966171168
          %v1237 = vunpack.c.0.s8 %v1236
          %v1238 = vlaneseq
          %v1239 = vshrl.u32 %v1238, 7
          %v1240 = vsub.s32 %v1237, %v1239
          %v1241 = vrot.slane %v1219, %v1240
          %v1243 = vunpack.c.l.s4 1966171168
          %v1244 = vunpack.c.0.s8 %v1243
          %v1245 = vlaneseq
          %v1246 = vshrl.u32 %v1245, 7
          %v1247 = vsub.s32 %v1244, %v1246
          %v1248 = vrot.slane %v1220, %v1247
          %v1249 = vcombine.low %v1227, %v1234
          %v1250 = vcombine.low %v1241, %v1248
          %v1252 = vunpack.c.l.s4 1966171168
          %v1253 = vunpack.c.0.s8 %v1252
          %v1254 = vlaneseq
          %v1255 = vshrl.u32 %v1254, 7
          %v1256 = vsub.s32 %v1253, %v1255
          %v1257 = vrot.slane %v1249, %v1256
          %v1259 = vunpack.c.l.s4 1966171168
          %v1260 = vunpack.c.0.s8 %v1259
          %v1261 = vlaneseq
          %v1262 = vshrl.u32 %v1261, 7
          %v1263 = vsub.s32 %v1260, %v1262
          %v1264 = vrot.slane %v1250, %v1263
          %v1265 = vcombine.low %v1257, %v1264
          %v1267 = vmax.f32 %v1208, %v1265
          %1268 = vst [vmem:[%s309] sm:$0xff] %v1267
        $region60: #{tpu_custom_call.1} parent=47 // pred_fallthru
          _
        %s1269 = sand.u32 %s196, 1
        %s1270 = scalar_lea.sflag [#allocation4], %s1269
        %s1271 = sand.u32 %s196, 1
        %s1272 = smul.addr %s1271, 8
        %s1273 = scalar_lea.vmem [#allocation5], %s1272
        // Predicated region
        $region61: #{tpu_custom_call.1} parent=47 // pred_check
          %p1274 = pneg %p206
        $region62: #{tpu_custom_call.1} parent=47 // pred_check_branch
          %1276 = sbr.rel (%p1274) target = $region64
        $region63: #{tpu_custom_call.1} parent=47 // pred_region
          %s1278 = ssub.s32 128, 128
          %1279 = vsyncadd %s1270, %s1278
          %s1280 = smul.addr %s26, 8
          %s1281 = smul.addr %s1280, 16
          %s1282 = scalar_lea.hbm %s7, %s1281
          %s1284 = sshll.u32 %s1273, 4
          %s1285 = int_to_ptr.vmem [resolvable:$true] %s1284
          %1287 = dma.vmem_to_hbm [thread:$0]  %s1285, 128, %s1282, %s1270
        $region64: #{tpu_custom_call.1} parent=47 // pred_fallthru
          _
      $region48: #{tpu_custom_call.1} parent=5 // pred_fallthru
        _
      %p1288 = scmp.le.s32.totalorder 2, %s17
      // Predicated region
      $region65: #{tpu_custom_call.1} parent=5 // pred_check
        %p1289 = pneg %p1288
      $region66: #{tpu_custom_call.1} parent=5 // pred_check_branch
        %1291 = sbr.rel (%p1289) target = $region68
      $region67: #{tpu_custom_call.1} parent=5 // pred_region
        %s1292 = ssub.s32 %s17, 2
        // Predicated region
        $region69: #{tpu_custom_call.1} parent=67 // pred_check
          %p1293 = pneg %p212
        $region70: #{tpu_custom_call.1} parent=67 // pred_check_branch
          %1295 = sbr.rel (%p1293) target = $region72
        $region71: #{tpu_custom_call.1} parent=67 // pred_region
          %s1296 = sand.u32 %s197, 1
          %s1297 = scalar_lea.sflag [#allocation4], %s1296
          %s1298 = sand.u32 %s197, 1
          %s1299 = smul.addr %s1298, 8
          %s1300 = scalar_lea.vmem [#allocation5], %s1299
          %1301 = dma.done %s1297, 128
        $region72: #{tpu_custom_call.1} parent=67 // pred_fallthru
          _
      $region68: #{tpu_custom_call.1} parent=5 // pred_fallthru
        _
    $region6: #{tpu_custom_call.1} parent=1 // loop_footer
      %s21 = sadd.s32 1, %s17
    $region7: #{tpu_custom_call.1} parent=1 // loop_footer_branch
      %16 = sbr.rel target = $region3
    $region8: #{tpu_custom_call.1} parent=1 // loop_exit
      _
    %1302 = vsyncpa [#allocation3], 1
    %s1303 = scalar_lea.sflag [#allocation3], 1
    %1304 = vsyncpa %s1303, 1
    %1305 = vsyncpa [#allocation4], 1
    %s1306 = scalar_lea.sflag [#allocation4], 1
    %1307 = vsyncpa %s1306, 1

</llo_original>
